<compile_context>
chip_gen: v5e
topology: v5e:2x2
jax: 0.10.0
libtpu: 0.0.40
codegen_flags: <defaults>
</compile_context>

<pallas_src>
import jax
import jax.numpy as jnp
from jax.experimental import pallas as pl
from jax.experimental.pallas import tpu as pltpu


_MIN_PALLAS_ELEMS = 128 * 1024            # below this, launch overhead dominates
_TARGET_BLOCK_BYTES = 8 * 1024 * 1024     # ~8 MiB per array per block
_VMEM_LIMIT_BYTES = 48 * 1024 * 1024      # explicit scoped-VMEM limit (<= v7x 64 MiB phys)


def _log_kernel(x_ref, o_ref):
    # Elementwise natural log on the whole VMEM tile.
    # Cast (int / bf16 / f16) -> f32 on the VPU (its slots have slack here),
    # take log on the EUP, then narrow back to the output dtype if needed.
    x = x_ref[...]
    if x.dtype != jnp.float32:
        x = x.astype(jnp.float32)
    o_ref[...] = jnp.log(x).astype(o_ref.dtype)


def _choose_layout(shape, n):
    """Pick (rows, cols) with rows*cols == n so the reshape is free."""
    # Preferred: the largest cols = 128*k (k <= 128) that divides n exactly,
    # so every output store is an unmasked full-lane vst.
    for k in range(128, 0, -1):
        cols = 128 * k
        if n % cols == 0:
            return n // cols, cols
    # Fallback: keep the natural last dim (or last two, collapsed, if the last
    # dim is tiny) as the lane axis; block last-dim == full array extent is legal.
    if len(shape) >= 2:
        cols = shape[-1]
        if cols < 128 and len(shape) >= 3:
            cols = shape[-2] * shape[-1]
        if cols >= 8:
            return n // cols, cols
    return None  # awkward ragged 1-D size — let XLA handle it


def _pick_block_rows(rows, cols, bytes_per_elem, sub, target_bytes):
    """Row-tile size: ~target_bytes per block, multiple of `sub` sublanes."""
    if rows <= sub:
        return rows  # single full-extent block on the sublane axis (legal)
    tr = (target_bytes // (cols * bytes_per_elem)) // sub * sub
    tr = max(sub, min(tr, rows))
    # Grid-step targets: >= 8 steps when the slab is big enough (>= 4 per v7x
    # TensorCore so prefetch/writeback overlap), otherwise >= 2 so the single
    # "parallel" axis can still shard across both v7x cores.
    for steps in (8, 2):
        if rows >= steps * sub:
            cap = max(sub, (rows // steps) // sub * sub)
            tr = min(tr, cap)
            break
    return tr


def _pick_blocks(rows, cols, bytes_per_elem, sub, target_bytes):
    """Choose a (tr, tc) block. tc == cols unless a full-width block is too big."""
    max_elems = max(sub * 128, target_bytes // bytes_per_elem)
    if cols * min(rows, sub) <= max_elems:
        # Full-width rows fit within the block budget: tile rows only.
        return _pick_block_rows(rows, cols, bytes_per_elem, sub, target_bytes), cols
    # Very wide slab: tile the lane axis too (multiples of 128), minimal rows.
    tr = rows if rows <= sub else sub
    tc = (max_elems // max(tr, 1)) // 128 * 128
    tc = max(128, min(tc, cols))
    return tr, tc


def pallas_log(x: jax.Array) -> jax.Array:
    """Elementwise log; Pallas TPU kernel for large inputs, XLA for tiny ones."""
    # torch.log on integer tensors returns float — mirror that (cast happens
    # *inside* the kernel to avoid a full HBM round-trip of an f32 copy).
    out_dtype = x.dtype if jnp.issubdtype(x.dtype, jnp.floating) else jnp.float32
    orig_shape = x.shape
    n = x.size

    if n < _MIN_PALLAS_ELEMS:
        return jnp.log(x).astype(out_dtype)

    layout = _choose_layout(orig_shape, n)
    if layout is None:
        return jnp.log(x).astype(out_dtype)
    rows, cols = layout

    in_item = jnp.dtype(x.dtype).itemsize
    out_item = jnp.dtype(out_dtype).itemsize
    # Native sublane packing: 8 rows for 4-byte, 16 for 2-byte, 32 for 1-byte.
    sub = 32 // max(1, min(4, min(in_item, out_item)))
    bpe = max(in_item, out_item)

    tr, tc = _pick_blocks(rows, cols, bpe, sub, _TARGET_BLOCK_BYTES)

    x2d = x.reshape(rows, cols)  # free: rows*cols == n, contiguous row-major
    grid = (pl.cdiv(rows, tr), pl.cdiv(cols, tc))

    # TODO(synk): if an xprof trace on v7x shows one idle TensorCore, switch
    # the row axis to pltpu.CORE_PARALLEL semantics (per perf review).
    out2d = pl.pallas_call(
        _log_kernel,
        out_shape=jax.ShapeDtypeStruct((rows, cols), out_dtype),
        grid=grid,
        in_specs=[pl.BlockSpec((tr, tc), lambda i, j: (i, j))],
        out_specs=pl.BlockSpec((tr, tc), lambda i, j: (i, j)),
        compiler_params=pltpu.CompilerParams(
            dimension_semantics=("parallel", "parallel"),
            vmem_limit_bytes=_VMEM_LIMIT_BYTES,
        ),
        cost_estimate=pl.CostEstimate(
            flops=0,
            transcendentals=int(n),
            bytes_accessed=int(n) * (in_item + out_item),
        ),
    )(x2d)

    return out2d.reshape(orig_shape)


if __name__ == "__main__":
    key = jax.random.PRNGKey(0)
    k1, k2, k3, k4, k5 = jax.random.split(key, 5)

    # 1) Small chrombpnet-like shape (counts head scale) — XLA fast path.
    x_small = jax.random.uniform(k1, (2, 4, 16), jnp.float32, minval=0.1, maxval=10.0)
    y_small = jax.block_until_ready(pallas_log(x_small))
    assert y_small.shape == x_small.shape and y_small.dtype == x_small.dtype
    assert jnp.allclose(y_small, jnp.log(x_small), atol=1e-6, rtol=1e-6)

    # 2) Larger f32 input exercising the Pallas kernel (lane-dense layout).
    x_big = jax.random.uniform(k2, (8, 4, 8192), jnp.float32, minval=0.1, maxval=10.0)
    y_big = jax.block_until_ready(pallas_log(x_big))
    assert y_big.shape == x_big.shape and y_big.dtype == x_big.dtype
    assert jnp.allclose(y_big, jnp.log(x_big), atol=1e-6, rtol=1e-6)

    # 3) Ragged total (not divisible by 128) — masked partial blocks, no padding.
    x_odd = jax.random.uniform(k3, (3, 5, 9160), jnp.float32, minval=0.1, maxval=10.0)
    y_odd = jax.block_until_ready(pallas_log(x_odd))
    assert y_odd.shape == x_odd.shape and y_odd.dtype == x_odd.dtype
    assert jnp.allclose(y_odd, jnp.log(x_odd), atol=1e-6, rtol=1e-6)

    # 4) Integer input — cast happens inside the kernel, output is float32.
    x_int = jax.random.randint(k4, (4, 8, 8192), 1, 100, dtype=jnp.int32)
    y_int = jax.block_until_ready(pallas_log(x_int))
    assert y_int.shape == x_int.shape and y_int.dtype == jnp.float32
    assert jnp.allclose(y_int, jnp.log(x_int.astype(jnp.float32)), atol=1e-6, rtol=1e-6)

    # 5) bf16 input — bf16 in/out (half HBM traffic), f32 compute inside.
    x_bf = jax.random.uniform(k5, (8, 4, 8192), jnp.float32,
                              minval=0.1, maxval=10.0).astype(jnp.bfloat16)
    y_bf = jax.block_until_ready(pallas_log(x_bf))
    assert y_bf.shape == x_bf.shape and y_bf.dtype == jnp.bfloat16
    assert jnp.allclose(y_bf.astype(jnp.float32),
                        jnp.log(x_bf.astype(jnp.float32)),
                        atol=5e-2, rtol=5e-2)

    print("KERNEL_OK")
</pallas_src>

<mosaic_0001>
module attributes {stable_mosaic.version = 11 : i64} {
  func.func @_log_kernel(%arg0: i32, %arg1: i32, %arg2: memref<8x16384xf32, #tpu.memory_space<vmem>>, %arg3: memref<8x16384xf32, #tpu.memory_space<vmem>>) attributes {dimension_semantics = [#tpu.dimension_semantics<parallel>, #tpu.dimension_semantics<parallel>], iteration_bounds = array<i64: 2, 1>, scalar_prefetch = 0 : i64, scratch_operands = 0 : i64, tpu.core_type = #tpu.core_type<tc>, window_params = [{transform_indices = @transform_0, window_bounds = array<i64: 8, 16384>}, {transform_indices = @transform_1, window_bounds = array<i64: 8, 16384>}]} {
    %c0 = arith.constant 0 : index
    %c0_0 = arith.constant 0 : index
    %0 = vector.load %arg2[%c0, %c0_0] : memref<8x16384xf32, #tpu.memory_space<vmem>>, vector<8x16384xf32>
    %1 = math.log %0 : vector<8x16384xf32>
    %c0_1 = arith.constant 0 : index
    %c0_2 = arith.constant 0 : index
    %2 = vector.load %arg3[%c0_1, %c0_2] : memref<8x16384xf32, #tpu.memory_space<vmem>>, vector<8x16384xf32>
    tpu.vector_store %arg3[%c0_1, %c0_2], %1 {strides = array<i32>} : memref<8x16384xf32, #tpu.memory_space<vmem>>, vector<8x16384xf32>,
    return
  }
  func.func @transform_0(%arg0: i32, %arg1: i32) -> (i32, i32) {
    %c0_i32 = arith.constant 0 : i32
    return %arg0, %arg1 : i32, i32
  }
  func.func @transform_1(%arg0: i32, %arg1: i32) -> (i32, i32) {
    %c0_i32 = arith.constant 0 : i32
    return %arg0, %arg1 : i32, i32
  }
}

</mosaic_0001>

<llo_original>
// kernel: tpu_custom_call.1
$region0: #{tpu_custom_call.1}
  #allocation0 [shape = 'u32[]', space=smem, size = 0x4, offset = 0x4, fixed_abs, tag = 'smem constant byte address 0x4 - core index']
  #allocation1 [shape = 'u32[72,128]{1,0:T(1,128)}', space=vmem, size = 0x9000, scoped, tag = 'internal scratch']
  %s0 = inlined_call_operand.hbm [shape: f32[16,16384], index: 0, kind: input, shape index: {}]
  %s1 = inlined_call_operand.hbm [shape: f32[16,16384], index: 1, kind: output, shape index: {}]
  %s2 = sld [smem:[#allocation0]]
  $region41: #{tpu_custom_call.1} parent=0
    _
  %s4 = ssub.s32 1, %s2
  %s5 = scalar_select 0, %s4, %s2
  $region1: #{tpu_custom_call.1} parent=0
    #allocation2 [shape = 'u8[1048576]{0}', space=vmem, size = 0x100000, scoped, tag = 'input window, operand 0']
    #allocation3 [shape = 's32[2]{0}', space=sflag, size = 0x8, scoped, tag = 'scoped memory for tpu_custom_call.1']
    #allocation4 [shape = 's32[2]{0}', space=sflag, size = 0x8, scoped, tag = 'scoped memory for tpu_custom_call.1']
    #allocation5 [shape = 'u8[1048576]{0}', space=vmem, size = 0x100000, scoped, tag = 'output window, operand 0']
    %6 = vsyncpa [#allocation3], 0
    %s7 = scalar_lea.sflag [#allocation3], 1
    %8 = vsyncpa %s7, 0
    %9 = vsyncpa [#allocation4], 0
    %s10 = scalar_lea.sflag [#allocation4], 1
    %11 = vsyncpa %s10, 0
    loop: start=0, step=1, limit=4
    $region2: #{tpu_custom_call.1} parent=1 // loop_pre_header
      _
    $region3: #{tpu_custom_call.1} parent=1 // loop_header
      %s13 = sphi 0, %s17
      %p14 = scmp.ge.s32.totalorder %s13, 4
      %s20 = sphi 0, %s32
      %s21 = sphi 0, %s28
      %s22 = sphi 0, %s20
      %s23 = sphi 0, %s21
      %s24 = sphi 0, %s22
      %s25 = sphi 0, %s23
      %s37 = sphi 0, %s39
      %s40 = sphi 0, %s37
      %s41 = sphi 0, %s40
      %s57 = sphi 0, %s41
      %s65 = sphi 0, %s67
      %s68 = sphi 0, %s65
      %s69 = sphi 0, %s68
      %s85 = sphi 0, %s69
    $region4: #{tpu_custom_call.1} parent=1 // loop_header_branch
      %16 = sbr.rel (%p14) target = $region8
    $region5: #{tpu_custom_call.1} parent=1 // loop_body
      %s18 = ssub.s32 %s13, 1
      %s19 = ssub.s32 %s13, 2
      %s26 = sadd.s32 1, %s21
      %p27 = scmp.ge.s32.totalorder %s26, 1
      %s28 = scalar_select %p27, 0, %s26
      %s29 = sadd.s32 1, %s20
      %s30 = scalar_select %p27, %s29, %s20
      %p31 = scmp.ge.s32.totalorder %s30, 2
      %s32 = scalar_select %p31, 0, %s30
      %s33 = ssub.s32 %s20, %s32
      %s34 = ssub.s32 %s21, %s28
      %s35 = sor.u32 %s33, %s34
      %p36 = scmp.eq.s32.totalorder %s35, 0
      %s38 = sadd.s32 %s37, 1
      %s39 = scalar_select %p36, %s37, %s38
      %p42 = pneg %p36
      %p43 = scmp.eq.s32.totalorder %s13, 1
      %p44 = por %p42, %p43
      %p45 = scmp.ne.s32.totalorder %s37, %s40
      %p46 = scmp.eq.s32.totalorder %s13, 0
      %p47 = por %p45, %p46
      %p48 = scmp.ne.s32.totalorder %s37, %s40
      %p49 = scmp.eq.s32.totalorder %s18, 1
      %p50 = por %p48, %p49
      %p51 = scmp.ne.s32.totalorder %s40, %s41
      %p52 = scmp.eq.s32.totalorder %s18, 0
      %p53 = por %p51, %p52
      %p54 = scmp.ne.s32.totalorder %s40, %s41
      %p55 = scmp.eq.s32.totalorder %s19, 1
      %p56 = por %p54, %p55
      %p58 = scmp.ne.s32.totalorder %s41, %s57
      %p59 = scmp.eq.s32.totalorder %s19, 0
      %p60 = por %p58, %p59
      %s61 = ssub.s32 %s20, %s32
      %s62 = ssub.s32 %s21, %s28
      %s63 = sor.u32 %s61, %s62
      %p64 = scmp.eq.s32.totalorder %s63, 0
      %s66 = sadd.s32 %s65, 1
      %s67 = scalar_select %p64, %s65, %s66
      %p70 = pneg %p64
      %p71 = scmp.eq.s32.totalorder %s13, 1
      %p72 = por %p70, %p71
      %p73 = scmp.ne.s32.totalorder %s65, %s68
      %p74 = scmp.eq.s32.totalorder %s13, 0
      %p75 = por %p73, %p74
      %p76 = scmp.ne.s32.totalorder %s65, %s68
      %p77 = scmp.eq.s32.totalorder %s18, 1
      %p78 = por %p76, %p77
      %p79 = scmp.ne.s32.totalorder %s68, %s69
      %p80 = scmp.eq.s32.totalorder %s18, 0
      %p81 = por %p79, %p80
      %p82 = scmp.ne.s32.totalorder %s68, %s69
      %p83 = scmp.eq.s32.totalorder %s19, 1
      %p84 = por %p82, %p83
      %p86 = scmp.ne.s32.totalorder %s69, %s85
      %p87 = scmp.eq.s32.totalorder %s19, 0
      %p88 = por %p86, %p87
      %p89 = scmp.le.s32.totalorder 1, %s13
      %p90 = scmp.lt.s32.totalorder %s13, 3
      %p91 = pnand %p89, %p90
      %p92 = pneg %p91
      // Predicated region
      $region9: #{tpu_custom_call.1} parent=5 // pred_check
        _
      $region10: #{tpu_custom_call.1} parent=5 // pred_check_branch
        %94 = sbr.rel (%p91) target = $region12
      $region11: #{tpu_custom_call.1} parent=5 // pred_region
        %s95 = ssub.s32 %s13, 1
      $region12: #{tpu_custom_call.1} parent=5 // pred_fallthru
        _
      %p96 = scmp.lt.s32.totalorder %s13, 2
      // Predicated region
      $region13: #{tpu_custom_call.1} parent=5 // pred_check
        %p97 = pneg %p96
      $region14: #{tpu_custom_call.1} parent=5 // pred_check_branch
        %99 = sbr.rel (%p97) target = $region16
      $region15: #{tpu_custom_call.1} parent=5 // pred_region
        // Predicated region
        $region17: #{tpu_custom_call.1} parent=15 // pred_check
          %p100 = pneg %p47
        $region18: #{tpu_custom_call.1} parent=15 // pred_check_branch
          %102 = sbr.rel (%p100) target = $region20
        $region19: #{tpu_custom_call.1} parent=15 // pred_region
          %s103 = sand.u32 %s37, 1
          %s104 = scalar_lea.sflag [#allocation3], %s103
          %s105 = sand.u32 %s37, 1
          %s106 = smul.addr %s105, 1024
          %s107 = scalar_lea.vmem [#allocation2], %s106
          %s108 = smul.u32 128, %s21
          %110 = vsyncadd %s104, 0
          %s111 = smul.addr %s20, 128
          %s112 = sadd.s32 %s108, %s111
          %s113 = smul.addr %s112, 8
          %s114 = scalar_lea.hbm %s0, %s113
          %s116 = sshll.u32 %s114, 4
          %s117 = int_to_ptr.hbm [resolvable:$true] %s116
          %s118 = sshll.u32 %s107, 4
          %s119 = int_to_ptr.vmem [resolvable:$true] %s118
          %121 = dma.hbm_to_vmem [thread:$0]  %s117, 16384, %s119, %s104
        $region20: #{tpu_custom_call.1} parent=15 // pred_fallthru
          _
      $region16: #{tpu_custom_call.1} parent=5 // pred_fallthru
        _
      %p122 = scmp.le.s32.totalorder 1, %s13
      %p123 = scmp.lt.s32.totalorder %s13, 3
      %p124 = pnand %p122, %p123
      %p125 = pneg %p124
      // Predicated region
      $region21: #{tpu_custom_call.1} parent=5 // pred_check
        _
      $region22: #{tpu_custom_call.1} parent=5 // pred_check_branch
        %127 = sbr.rel (%p124) target = $region24
      $region23: #{tpu_custom_call.1} parent=5 // pred_region
        %s128 = ssub.s32 %s13, 1
        %s129 = sand.u32 %s40, 1
        %s130 = scalar_lea.sflag [#allocation3], %s129
        %s131 = sand.u32 %s40, 1
        %s132 = smul.addr %s131, 1024
        %s133 = scalar_lea.vmem [#allocation2], %s132
        // Predicated region
        $region25: #{tpu_custom_call.1} parent=23 // pred_check
          %p134 = pneg %p53
        $region26: #{tpu_custom_call.1} parent=23 // pred_check_branch
          %136 = sbr.rel (%p134) target = $region28
        $region27: #{tpu_custom_call.1} parent=23 // pred_region
          %138 = dma.done %s130, 16384
        $region28: #{tpu_custom_call.1} parent=23 // pred_fallthru
          _
        %s139 = sand.u32 %s40, 1
        %s140 = scalar_lea.sflag [#allocation3], %s139
        %s141 = sand.u32 %s40, 1
        %s142 = smul.addr %s141, 1024
        %s143 = scalar_lea.vmem [#allocation2], %s142
        %p144 = pneg %p53
        %p145 = pneg %p50
        %p146 = pneg %p81
        %p147 = pneg %p78
        %s148 = sand.u32 %s68, 1
        %s149 = scalar_lea.sflag [#allocation4], %s148
        %s150 = sand.u32 %s68, 1
        %s151 = smul.addr %s150, 1024
        %s152 = scalar_lea.vmem [#allocation5], %s151
        %s153 = smul.u32 128, %s23
        %s154 = smul.u32 128, %s23
        %v155 = vld [vmem:[%s133] sm:$0xff]
        %v156 = vld [vmem:[%s133 + $0x8] sm:$0xff]
        %v157 = vld [vmem:[%s133 + $0x10] sm:$0xff]
        %v158 = vld [vmem:[%s133 + $0x18] sm:$0xff]
        %v159 = vld [vmem:[%s133 + $0x20] sm:$0xff]
        %v160 = vld [vmem:[%s133 + $0x28] sm:$0xff]
        %v161 = vld [vmem:[%s133 + $0x30] sm:$0xff]
        %v162 = vld [vmem:[%s133 + $0x38] sm:$0xff]
        %v163 = vld [vmem:[%s133 + $0x40] sm:$0xff]
        %v164 = vld [vmem:[%s133 + $0x48] sm:$0xff]
        %v165 = vld [vmem:[%s133 + $0x50] sm:$0xff]
        %v166 = vld [vmem:[%s133 + $0x58] sm:$0xff]
        %v167 = vld [vmem:[%s133 + $0x60] sm:$0xff]
        %v168 = vld [vmem:[%s133 + $0x68] sm:$0xff]
        %v169 = vld [vmem:[%s133 + $0x70] sm:$0xff]
        %v170 = vld [vmem:[%s133 + $0x78] sm:$0xff]
        %v171 = vld [vmem:[%s133 + $0x80] sm:$0xff]
        %v172 = vld [vmem:[%s133 + $0x88] sm:$0xff]
        %v173 = vld [vmem:[%s133 + $0x90] sm:$0xff]
        %v174 = vld [vmem:[%s133 + $0x98] sm:$0xff]
        %v175 = vld [vmem:[%s133 + $0xa0] sm:$0xff]
        %v176 = vld [vmem:[%s133 + $0xa8] sm:$0xff]
        %v177 = vld [vmem:[%s133 + $0xb0] sm:$0xff]
        %v178 = vld [vmem:[%s133 + $0xb8] sm:$0xff]
        %v179 = vld [vmem:[%s133 + $0xc0] sm:$0xff]
        %v180 = vld [vmem:[%s133 + $0xc8] sm:$0xff]
        %v181 = vld [vmem:[%s133 + $0xd0] sm:$0xff]
        %v182 = vld [vmem:[%s133 + $0xd8] sm:$0xff]
        %v183 = vld [vmem:[%s133 + $0xe0] sm:$0xff]
        %v184 = vld [vmem:[%s133 + $0xe8] sm:$0xff]
        %v185 = vld [vmem:[%s133 + $0xf0] sm:$0xff]
        %v186 = vld [vmem:[%s133 + $0xf8] sm:$0xff]
        %v187 = vld [vmem:[%s133 + $0x100] sm:$0xff]
        %v188 = vld [vmem:[%s133 + $0x108] sm:$0xff]
        %v189 = vld [vmem:[%s133 + $0x110] sm:$0xff]
        %v190 = vld [vmem:[%s133 + $0x118] sm:$0xff]
        %v191 = vld [vmem:[%s133 + $0x120] sm:$0xff]
        %v192 = vld [vmem:[%s133 + $0x128] sm:$0xff]
        %v193 = vld [vmem:[%s133 + $0x130] sm:$0xff]
        %v194 = vld [vmem:[%s133 + $0x138] sm:$0xff]
        %v195 = vld [vmem:[%s133 + $0x140] sm:$0xff]
        %v196 = vld [vmem:[%s133 + $0x148] sm:$0xff]
        %v197 = vld [vmem:[%s133 + $0x150] sm:$0xff]
        %v198 = vld [vmem:[%s133 + $0x158] sm:$0xff]
        %v199 = vld [vmem:[%s133 + $0x160] sm:$0xff]
        %v200 = vld [vmem:[%s133 + $0x168] sm:$0xff]
        %v201 = vld [vmem:[%s133 + $0x170] sm:$0xff]
        %v202 = vld [vmem:[%s133 + $0x178] sm:$0xff]
        %v203 = vld [vmem:[%s133 + $0x180] sm:$0xff]
        %v204 = vld [vmem:[%s133 + $0x188] sm:$0xff]
        %v205 = vld [vmem:[%s133 + $0x190] sm:$0xff]
        %v206 = vld [vmem:[%s133 + $0x198] sm:$0xff]
        %v207 = vld [vmem:[%s133 + $0x1a0] sm:$0xff]
        %v208 = vld [vmem:[%s133 + $0x1a8] sm:$0xff]
        %v209 = vld [vmem:[%s133 + $0x1b0] sm:$0xff]
        %v210 = vld [vmem:[%s133 + $0x1b8] sm:$0xff]
        %v211 = vld [vmem:[%s133 + $0x1c0] sm:$0xff]
        %v212 = vld [vmem:[%s133 + $0x1c8] sm:$0xff]
        %v213 = vld [vmem:[%s133 + $0x1d0] sm:$0xff]
        %v214 = vld [vmem:[%s133 + $0x1d8] sm:$0xff]
        %v215 = vld [vmem:[%s133 + $0x1e0] sm:$0xff]
        %v216 = vld [vmem:[%s133 + $0x1e8] sm:$0xff]
        %v217 = vld [vmem:[%s133 + $0x1f0] sm:$0xff]
        %v218 = vld [vmem:[%s133 + $0x1f8] sm:$0xff]
        %v219 = vld [vmem:[%s133 + $0x200] sm:$0xff]
        %v220 = vld [vmem:[%s133 + $0x208] sm:$0xff]
        %v221 = vld [vmem:[%s133 + $0x210] sm:$0xff]
        %v222 = vld [vmem:[%s133 + $0x218] sm:$0xff]
        %v223 = vld [vmem:[%s133 + $0x220] sm:$0xff]
        %v224 = vld [vmem:[%s133 + $0x228] sm:$0xff]
        %v225 = vld [vmem:[%s133 + $0x230] sm:$0xff]
        %v226 = vld [vmem:[%s133 + $0x238] sm:$0xff]
        %v227 = vld [vmem:[%s133 + $0x240] sm:$0xff]
        %v228 = vld [vmem:[%s133 + $0x248] sm:$0xff]
        %v229 = vld [vmem:[%s133 + $0x250] sm:$0xff]
        %v230 = vld [vmem:[%s133 + $0x258] sm:$0xff]
        %v231 = vld [vmem:[%s133 + $0x260] sm:$0xff]
        %v232 = vld [vmem:[%s133 + $0x268] sm:$0xff]
        %v233 = vld [vmem:[%s133 + $0x270] sm:$0xff]
        %v234 = vld [vmem:[%s133 + $0x278] sm:$0xff]
        %v235 = vld [vmem:[%s133 + $0x280] sm:$0xff]
        %v236 = vld [vmem:[%s133 + $0x288] sm:$0xff]
        %v237 = vld [vmem:[%s133 + $0x290] sm:$0xff]
        %v238 = vld [vmem:[%s133 + $0x298] sm:$0xff]
        %v239 = vld [vmem:[%s133 + $0x2a0] sm:$0xff]
        %v240 = vld [vmem:[%s133 + $0x2a8] sm:$0xff]
        %v241 = vld [vmem:[%s133 + $0x2b0] sm:$0xff]
        %v242 = vld [vmem:[%s133 + $0x2b8] sm:$0xff]
        %v243 = vld [vmem:[%s133 + $0x2c0] sm:$0xff]
        %v244 = vld [vmem:[%s133 + $0x2c8] sm:$0xff]
        %v245 = vld [vmem:[%s133 + $0x2d0] sm:$0xff]
        %v246 = vld [vmem:[%s133 + $0x2d8] sm:$0xff]
        %v247 = vld [vmem:[%s133 + $0x2e0] sm:$0xff]
        %v248 = vld [vmem:[%s133 + $0x2e8] sm:$0xff]
        %v249 = vld [vmem:[%s133 + $0x2f0] sm:$0xff]
        %v250 = vld [vmem:[%s133 + $0x2f8] sm:$0xff]
        %v251 = vld [vmem:[%s133 + $0x300] sm:$0xff]
        %v252 = vld [vmem:[%s133 + $0x308] sm:$0xff]
        %v253 = vld [vmem:[%s133 + $0x310] sm:$0xff]
        %v254 = vld [vmem:[%s133 + $0x318] sm:$0xff]
        %v255 = vld [vmem:[%s133 + $0x320] sm:$0xff]
        %v256 = vld [vmem:[%s133 + $0x328] sm:$0xff]
        %v257 = vld [vmem:[%s133 + $0x330] sm:$0xff]
        %v258 = vld [vmem:[%s133 + $0x338] sm:$0xff]
        %v259 = vld [vmem:[%s133 + $0x340] sm:$0xff]
        %v260 = vld [vmem:[%s133 + $0x348] sm:$0xff]
        %v261 = vld [vmem:[%s133 + $0x350] sm:$0xff]
        %v262 = vld [vmem:[%s133 + $0x358] sm:$0xff]
        %v263 = vld [vmem:[%s133 + $0x360] sm:$0xff]
        %v264 = vld [vmem:[%s133 + $0x368] sm:$0xff]
        %v265 = vld [vmem:[%s133 + $0x370] sm:$0xff]
        %v266 = vld [vmem:[%s133 + $0x378] sm:$0xff]
        %v267 = vld [vmem:[%s133 + $0x380] sm:$0xff]
        %v268 = vld [vmem:[%s133 + $0x388] sm:$0xff]
        %v269 = vld [vmem:[%s133 + $0x390] sm:$0xff]
        %v270 = vld [vmem:[%s133 + $0x398] sm:$0xff]
        %v271 = vld [vmem:[%s133 + $0x3a0] sm:$0xff]
        %v272 = vld [vmem:[%s133 + $0x3a8] sm:$0xff]
        %v273 = vld [vmem:[%s133 + $0x3b0] sm:$0xff]
        %v274 = vld [vmem:[%s133 + $0x3b8] sm:$0xff]
        %v275 = vld [vmem:[%s133 + $0x3c0] sm:$0xff]
        %v276 = vld [vmem:[%s133 + $0x3c8] sm:$0xff]
        %v277 = vld [vmem:[%s133 + $0x3d0] sm:$0xff]
        %v278 = vld [vmem:[%s133 + $0x3d8] sm:$0xff]
        %v279 = vld [vmem:[%s133 + $0x3e0] sm:$0xff]
        %v280 = vld [vmem:[%s133 + $0x3e8] sm:$0xff]
        %v281 = vld [vmem:[%s133 + $0x3f0] sm:$0xff]
        %v282 = vld [vmem:[%s133 + $0x3f8] sm:$0xff]
        %v283 = vlog2.pop %v155
        %v284 = vmul.f32 %v283, 0.6931472
        %v285 = vlog2.pop %v156
        %v286 = vmul.f32 %v285, 0.6931472
        %v287 = vlog2.pop %v157
        %v288 = vmul.f32 %v287, 0.6931472
        %v289 = vlog2.pop %v158
        %v290 = vmul.f32 %v289, 0.6931472
        %v291 = vlog2.pop %v159
        %v292 = vmul.f32 %v291, 0.6931472
        %v293 = vlog2.pop %v160
        %v294 = vmul.f32 %v293, 0.6931472
        %v295 = vlog2.pop %v161
        %v296 = vmul.f32 %v295, 0.6931472
        %v297 = vlog2.pop %v162
        %v298 = vmul.f32 %v297, 0.6931472
        %v299 = vlog2.pop %v163
        %v300 = vmul.f32 %v299, 0.6931472
        %v301 = vlog2.pop %v164
        %v302 = vmul.f32 %v301, 0.6931472
        %v303 = vlog2.pop %v165
        %v304 = vmul.f32 %v303, 0.6931472
        %v305 = vlog2.pop %v166
        %v306 = vmul.f32 %v305, 0.6931472
        %v307 = vlog2.pop %v167
        %v308 = vmul.f32 %v307, 0.6931472
        %v309 = vlog2.pop %v168
        %v310 = vmul.f32 %v309, 0.6931472
        %v311 = vlog2.pop %v169
        %v312 = vmul.f32 %v311, 0.6931472
        %v313 = vlog2.pop %v170
        %v314 = vmul.f32 %v313, 0.6931472
        %v315 = vlog2.pop %v171
        %v316 = vmul.f32 %v315, 0.6931472
        %v317 = vlog2.pop %v172
        %v318 = vmul.f32 %v317, 0.6931472
        %v319 = vlog2.pop %v173
        %v320 = vmul.f32 %v319, 0.6931472
        %v321 = vlog2.pop %v174
        %v322 = vmul.f32 %v321, 0.6931472
        %v323 = vlog2.pop %v175
        %v324 = vmul.f32 %v323, 0.6931472
        %v325 = vlog2.pop %v176
        %v326 = vmul.f32 %v325, 0.6931472
        %v327 = vlog2.pop %v177
        %v328 = vmul.f32 %v327, 0.6931472
        %v329 = vlog2.pop %v178
        %v330 = vmul.f32 %v329, 0.6931472
        %v331 = vlog2.pop %v179
        %v332 = vmul.f32 %v331, 0.6931472
        %v333 = vlog2.pop %v180
        %v334 = vmul.f32 %v333, 0.6931472
        %v335 = vlog2.pop %v181
        %v336 = vmul.f32 %v335, 0.6931472
        %v337 = vlog2.pop %v182
        %v338 = vmul.f32 %v337, 0.6931472
        %v339 = vlog2.pop %v183
        %v340 = vmul.f32 %v339, 0.6931472
        %v341 = vlog2.pop %v184
        %v342 = vmul.f32 %v341, 0.6931472
        %v343 = vlog2.pop %v185
        %v344 = vmul.f32 %v343, 0.6931472
        %v345 = vlog2.pop %v186
        %v346 = vmul.f32 %v345, 0.6931472
        %v347 = vlog2.pop %v187
        %v348 = vmul.f32 %v347, 0.6931472
        %v349 = vlog2.pop %v188
        %v350 = vmul.f32 %v349, 0.6931472
        %v351 = vlog2.pop %v189
        %v352 = vmul.f32 %v351, 0.6931472
        %v353 = vlog2.pop %v190
        %v354 = vmul.f32 %v353, 0.6931472
        %v355 = vlog2.pop %v191
        %v356 = vmul.f32 %v355, 0.6931472
        %v357 = vlog2.pop %v192
        %v358 = vmul.f32 %v357, 0.6931472
        %v359 = vlog2.pop %v193
        %v360 = vmul.f32 %v359, 0.6931472
        %v361 = vlog2.pop %v194
        %v362 = vmul.f32 %v361, 0.6931472
        %v363 = vlog2.pop %v195
        %v364 = vmul.f32 %v363, 0.6931472
        %v365 = vlog2.pop %v196
        %v366 = vmul.f32 %v365, 0.6931472
        %v367 = vlog2.pop %v197
        %v368 = vmul.f32 %v367, 0.6931472
        %v369 = vlog2.pop %v198
        %v370 = vmul.f32 %v369, 0.6931472
        %v371 = vlog2.pop %v199
        %v372 = vmul.f32 %v371, 0.6931472
        %v373 = vlog2.pop %v200
        %v374 = vmul.f32 %v373, 0.6931472
        %v375 = vlog2.pop %v201
        %v376 = vmul.f32 %v375, 0.6931472
        %v377 = vlog2.pop %v202
        %v378 = vmul.f32 %v377, 0.6931472
        %v379 = vlog2.pop %v203
        %v380 = vmul.f32 %v379, 0.6931472
        %v381 = vlog2.pop %v204
        %v382 = vmul.f32 %v381, 0.6931472
        %v383 = vlog2.pop %v205
        %v384 = vmul.f32 %v383, 0.6931472
        %v385 = vlog2.pop %v206
        %v386 = vmul.f32 %v385, 0.6931472
        %v387 = vlog2.pop %v207
        %v388 = vmul.f32 %v387, 0.6931472
        %v389 = vlog2.pop %v208
        %v390 = vmul.f32 %v389, 0.6931472
        %v391 = vlog2.pop %v209
        %v392 = vmul.f32 %v391, 0.6931472
        %v393 = vlog2.pop %v210
        %v394 = vmul.f32 %v393, 0.6931472
        %v395 = vlog2.pop %v211
        %v396 = vmul.f32 %v395, 0.6931472
        %v397 = vlog2.pop %v212
        %v398 = vmul.f32 %v397, 0.6931472
        %v399 = vlog2.pop %v213
        %v400 = vmul.f32 %v399, 0.6931472
        %v401 = vlog2.pop %v214
        %v402 = vmul.f32 %v401, 0.6931472
        %v403 = vlog2.pop %v215
        %v404 = vmul.f32 %v403, 0.6931472
        %v405 = vlog2.pop %v216
        %v406 = vmul.f32 %v405, 0.6931472
        %v407 = vlog2.pop %v217
        %v408 = vmul.f32 %v407, 0.6931472
        %v409 = vlog2.pop %v218
        %v410 = vmul.f32 %v409, 0.6931472
        %v411 = vlog2.pop %v219
        %v412 = vmul.f32 %v411, 0.6931472
        %v413 = vlog2.pop %v220
        %v414 = vmul.f32 %v413, 0.6931472
        %v415 = vlog2.pop %v221
        %v416 = vmul.f32 %v415, 0.6931472
        %v417 = vlog2.pop %v222
        %v418 = vmul.f32 %v417, 0.6931472
        %v419 = vlog2.pop %v223
        %v420 = vmul.f32 %v419, 0.6931472
        %v421 = vlog2.pop %v224
        %v422 = vmul.f32 %v421, 0.6931472
        %v423 = vlog2.pop %v225
        %v424 = vmul.f32 %v423, 0.6931472
        %v425 = vlog2.pop %v226
        %v426 = vmul.f32 %v425, 0.6931472
        %v427 = vlog2.pop %v227
        %v428 = vmul.f32 %v427, 0.6931472
        %v429 = vlog2.pop %v228
        %v430 = vmul.f32 %v429, 0.6931472
        %v431 = vlog2.pop %v229
        %v432 = vmul.f32 %v431, 0.6931472
        %v433 = vlog2.pop %v230
        %v434 = vmul.f32 %v433, 0.6931472
        %v435 = vlog2.pop %v231
        %v436 = vmul.f32 %v435, 0.6931472
        %v437 = vlog2.pop %v232
        %v438 = vmul.f32 %v437, 0.6931472
        %v439 = vlog2.pop %v233
        %v440 = vmul.f32 %v439, 0.6931472
        %v441 = vlog2.pop %v234
        %v442 = vmul.f32 %v441, 0.6931472
        %v443 = vlog2.pop %v235
        %v444 = vmul.f32 %v443, 0.6931472
        %v445 = vlog2.pop %v236
        %v446 = vmul.f32 %v445, 0.6931472
        %v447 = vlog2.pop %v237
        %v448 = vmul.f32 %v447, 0.6931472
        %v449 = vlog2.pop %v238
        %v450 = vmul.f32 %v449, 0.6931472
        %v451 = vlog2.pop %v239
        %v452 = vmul.f32 %v451, 0.6931472
        %v453 = vlog2.pop %v240
        %v454 = vmul.f32 %v453, 0.6931472
        %v455 = vlog2.pop %v241
        %v456 = vmul.f32 %v455, 0.6931472
        %v457 = vlog2.pop %v242
        %v458 = vmul.f32 %v457, 0.6931472
        %v459 = vlog2.pop %v243
        %v460 = vmul.f32 %v459, 0.6931472
        %v461 = vlog2.pop %v244
        %v462 = vmul.f32 %v461, 0.6931472
        %v463 = vlog2.pop %v245
        %v464 = vmul.f32 %v463, 0.6931472
        %v465 = vlog2.pop %v246
        %v466 = vmul.f32 %v465, 0.6931472
        %v467 = vlog2.pop %v247
        %v468 = vmul.f32 %v467, 0.6931472
        %v469 = vlog2.pop %v248
        %v470 = vmul.f32 %v469, 0.6931472
        %v471 = vlog2.pop %v249
        %v472 = vmul.f32 %v471, 0.6931472
        %v473 = vlog2.pop %v250
        %v474 = vmul.f32 %v473, 0.6931472
        %v475 = vlog2.pop %v251
        %v476 = vmul.f32 %v475, 0.6931472
        %v477 = vlog2.pop %v252
        %v478 = vmul.f32 %v477, 0.6931472
        %v479 = vlog2.pop %v253
        %v480 = vmul.f32 %v479, 0.6931472
        %v481 = vlog2.pop %v254
        %v482 = vmul.f32 %v481, 0.6931472
        %v483 = vlog2.pop %v255
        %v484 = vmul.f32 %v483, 0.6931472
        %v485 = vlog2.pop %v256
        %v486 = vmul.f32 %v485, 0.6931472
        %v487 = vlog2.pop %v257
        %v488 = vmul.f32 %v487, 0.6931472
        %v489 = vlog2.pop %v258
        %v490 = vmul.f32 %v489, 0.6931472
        %v491 = vlog2.pop %v259
        %v492 = vmul.f32 %v491, 0.6931472
        %v493 = vlog2.pop %v260
        %v494 = vmul.f32 %v493, 0.6931472
        %v495 = vlog2.pop %v261
        %v496 = vmul.f32 %v495, 0.6931472
        %v497 = vlog2.pop %v262
        %v498 = vmul.f32 %v497, 0.6931472
        %v499 = vlog2.pop %v263
        %v500 = vmul.f32 %v499, 0.6931472
        %v501 = vlog2.pop %v264
        %v502 = vmul.f32 %v501, 0.6931472
        %v503 = vlog2.pop %v265
        %v504 = vmul.f32 %v503, 0.6931472
        %v505 = vlog2.pop %v266
        %v506 = vmul.f32 %v505, 0.6931472
        %v507 = vlog2.pop %v267
        %v508 = vmul.f32 %v507, 0.6931472
        %v509 = vlog2.pop %v268
        %v510 = vmul.f32 %v509, 0.6931472
        %v511 = vlog2.pop %v269
        %v512 = vmul.f32 %v511, 0.6931472
        %v513 = vlog2.pop %v270
        %v514 = vmul.f32 %v513, 0.6931472
        %v515 = vlog2.pop %v271
        %v516 = vmul.f32 %v515, 0.6931472
        %v517 = vlog2.pop %v272
        %v518 = vmul.f32 %v517, 0.6931472
        %v519 = vlog2.pop %v273
        %v520 = vmul.f32 %v519, 0.6931472
        %v521 = vlog2.pop %v274
        %v522 = vmul.f32 %v521, 0.6931472
        %v523 = vlog2.pop %v275
        %v524 = vmul.f32 %v523, 0.6931472
        %v525 = vlog2.pop %v276
        %v526 = vmul.f32 %v525, 0.6931472
        %v527 = vlog2.pop %v277
        %v528 = vmul.f32 %v527, 0.6931472
        %v529 = vlog2.pop %v278
        %v530 = vmul.f32 %v529, 0.6931472
        %v531 = vlog2.pop %v279
        %v532 = vmul.f32 %v531, 0.6931472
        %v533 = vlog2.pop %v280
        %v534 = vmul.f32 %v533, 0.6931472
        %v535 = vlog2.pop %v281
        %v536 = vmul.f32 %v535, 0.6931472
        %v537 = vlog2.pop %v282
        %v538 = vmul.f32 %v537, 0.6931472
        %539 = vst [vmem:[%s152] sm:$0xff] %v284
        %540 = vst [vmem:[%s152 + $0x8] sm:$0xff] %v286
        %541 = vst [vmem:[%s152 + $0x10] sm:$0xff] %v288
        %542 = vst [vmem:[%s152 + $0x18] sm:$0xff] %v290
        %543 = vst [vmem:[%s152 + $0x20] sm:$0xff] %v292
        %544 = vst [vmem:[%s152 + $0x28] sm:$0xff] %v294
        %545 = vst [vmem:[%s152 + $0x30] sm:$0xff] %v296
        %546 = vst [vmem:[%s152 + $0x38] sm:$0xff] %v298
        %547 = vst [vmem:[%s152 + $0x40] sm:$0xff] %v300
        %548 = vst [vmem:[%s152 + $0x48] sm:$0xff] %v302
        %549 = vst [vmem:[%s152 + $0x50] sm:$0xff] %v304
        %550 = vst [vmem:[%s152 + $0x58] sm:$0xff] %v306
        %551 = vst [vmem:[%s152 + $0x60] sm:$0xff] %v308
        %552 = vst [vmem:[%s152 + $0x68] sm:$0xff] %v310
        %553 = vst [vmem:[%s152 + $0x70] sm:$0xff] %v312
        %554 = vst [vmem:[%s152 + $0x78] sm:$0xff] %v314
        %555 = vst [vmem:[%s152 + $0x80] sm:$0xff] %v316
        %556 = vst [vmem:[%s152 + $0x88] sm:$0xff] %v318
        %557 = vst [vmem:[%s152 + $0x90] sm:$0xff] %v320
        %558 = vst [vmem:[%s152 + $0x98] sm:$0xff] %v322
        %559 = vst [vmem:[%s152 + $0xa0] sm:$0xff] %v324
        %560 = vst [vmem:[%s152 + $0xa8] sm:$0xff] %v326
        %561 = vst [vmem:[%s152 + $0xb0] sm:$0xff] %v328
        %562 = vst [vmem:[%s152 + $0xb8] sm:$0xff] %v330
        %563 = vst [vmem:[%s152 + $0xc0] sm:$0xff] %v332
        %564 = vst [vmem:[%s152 + $0xc8] sm:$0xff] %v334
        %565 = vst [vmem:[%s152 + $0xd0] sm:$0xff] %v336
        %566 = vst [vmem:[%s152 + $0xd8] sm:$0xff] %v338
        %567 = vst [vmem:[%s152 + $0xe0] sm:$0xff] %v340
        %568 = vst [vmem:[%s152 + $0xe8] sm:$0xff] %v342
        %569 = vst [vmem:[%s152 + $0xf0] sm:$0xff] %v344
        %570 = vst [vmem:[%s152 + $0xf8] sm:$0xff] %v346
        %571 = vst [vmem:[%s152 + $0x100] sm:$0xff] %v348
        %572 = vst [vmem:[%s152 + $0x108] sm:$0xff] %v350
        %573 = vst [vmem:[%s152 + $0x110] sm:$0xff] %v352
        %574 = vst [vmem:[%s152 + $0x118] sm:$0xff] %v354
        %575 = vst [vmem:[%s152 + $0x120] sm:$0xff] %v356
        %576 = vst [vmem:[%s152 + $0x128] sm:$0xff] %v358
        %577 = vst [vmem:[%s152 + $0x130] sm:$0xff] %v360
        %578 = vst [vmem:[%s152 + $0x138] sm:$0xff] %v362
        %579 = vst [vmem:[%s152 + $0x140] sm:$0xff] %v364
        %580 = vst [vmem:[%s152 + $0x148] sm:$0xff] %v366
        %581 = vst [vmem:[%s152 + $0x150] sm:$0xff] %v368
        %582 = vst [vmem:[%s152 + $0x158] sm:$0xff] %v370
        %583 = vst [vmem:[%s152 + $0x160] sm:$0xff] %v372
        %584 = vst [vmem:[%s152 + $0x168] sm:$0xff] %v374
        %585 = vst [vmem:[%s152 + $0x170] sm:$0xff] %v376
        %586 = vst [vmem:[%s152 + $0x178] sm:$0xff] %v378
        %587 = vst [vmem:[%s152 + $0x180] sm:$0xff] %v380
        %588 = vst [vmem:[%s152 + $0x188] sm:$0xff] %v382
        %589 = vst [vmem:[%s152 + $0x190] sm:$0xff] %v384
        %590 = vst [vmem:[%s152 + $0x198] sm:$0xff] %v386
        %591 = vst [vmem:[%s152 + $0x1a0] sm:$0xff] %v388
        %592 = vst [vmem:[%s152 + $0x1a8] sm:$0xff] %v390
        %593 = vst [vmem:[%s152 + $0x1b0] sm:$0xff] %v392
        %594 = vst [vmem:[%s152 + $0x1b8] sm:$0xff] %v394
        %595 = vst [vmem:[%s152 + $0x1c0] sm:$0xff] %v396
        %596 = vst [vmem:[%s152 + $0x1c8] sm:$0xff] %v398
        %597 = vst [vmem:[%s152 + $0x1d0] sm:$0xff] %v400
        %598 = vst [vmem:[%s152 + $0x1d8] sm:$0xff] %v402
        %599 = vst [vmem:[%s152 + $0x1e0] sm:$0xff] %v404
        %600 = vst [vmem:[%s152 + $0x1e8] sm:$0xff] %v406
        %601 = vst [vmem:[%s152 + $0x1f0] sm:$0xff] %v408
        %602 = vst [vmem:[%s152 + $0x1f8] sm:$0xff] %v410
        %603 = vst [vmem:[%s152 + $0x200] sm:$0xff] %v412
        %604 = vst [vmem:[%s152 + $0x208] sm:$0xff] %v414
        %605 = vst [vmem:[%s152 + $0x210] sm:$0xff] %v416
        %606 = vst [vmem:[%s152 + $0x218] sm:$0xff] %v418
        %607 = vst [vmem:[%s152 + $0x220] sm:$0xff] %v420
        %608 = vst [vmem:[%s152 + $0x228] sm:$0xff] %v422
        %609 = vst [vmem:[%s152 + $0x230] sm:$0xff] %v424
        %610 = vst [vmem:[%s152 + $0x238] sm:$0xff] %v426
        %611 = vst [vmem:[%s152 + $0x240] sm:$0xff] %v428
        %612 = vst [vmem:[%s152 + $0x248] sm:$0xff] %v430
        %613 = vst [vmem:[%s152 + $0x250] sm:$0xff] %v432
        %614 = vst [vmem:[%s152 + $0x258] sm:$0xff] %v434
        %615 = vst [vmem:[%s152 + $0x260] sm:$0xff] %v436
        %616 = vst [vmem:[%s152 + $0x268] sm:$0xff] %v438
        %617 = vst [vmem:[%s152 + $0x270] sm:$0xff] %v440
        %618 = vst [vmem:[%s152 + $0x278] sm:$0xff] %v442
        %619 = vst [vmem:[%s152 + $0x280] sm:$0xff] %v444
        %620 = vst [vmem:[%s152 + $0x288] sm:$0xff] %v446
        %621 = vst [vmem:[%s152 + $0x290] sm:$0xff] %v448
        %622 = vst [vmem:[%s152 + $0x298] sm:$0xff] %v450
        %623 = vst [vmem:[%s152 + $0x2a0] sm:$0xff] %v452
        %624 = vst [vmem:[%s152 + $0x2a8] sm:$0xff] %v454
        %625 = vst [vmem:[%s152 + $0x2b0] sm:$0xff] %v456
        %626 = vst [vmem:[%s152 + $0x2b8] sm:$0xff] %v458
        %627 = vst [vmem:[%s152 + $0x2c0] sm:$0xff] %v460
        %628 = vst [vmem:[%s152 + $0x2c8] sm:$0xff] %v462
        %629 = vst [vmem:[%s152 + $0x2d0] sm:$0xff] %v464
        %630 = vst [vmem:[%s152 + $0x2d8] sm:$0xff] %v466
        %631 = vst [vmem:[%s152 + $0x2e0] sm:$0xff] %v468
        %632 = vst [vmem:[%s152 + $0x2e8] sm:$0xff] %v470
        %633 = vst [vmem:[%s152 + $0x2f0] sm:$0xff] %v472
        %634 = vst [vmem:[%s152 + $0x2f8] sm:$0xff] %v474
        %635 = vst [vmem:[%s152 + $0x300] sm:$0xff] %v476
        %636 = vst [vmem:[%s152 + $0x308] sm:$0xff] %v478
        %637 = vst [vmem:[%s152 + $0x310] sm:$0xff] %v480
        %638 = vst [vmem:[%s152 + $0x318] sm:$0xff] %v482
        %639 = vst [vmem:[%s152 + $0x320] sm:$0xff] %v484
        %640 = vst [vmem:[%s152 + $0x328] sm:$0xff] %v486
        %641 = vst [vmem:[%s152 + $0x330] sm:$0xff] %v488
        %642 = vst [vmem:[%s152 + $0x338] sm:$0xff] %v490
        %643 = vst [vmem:[%s152 + $0x340] sm:$0xff] %v492
        %644 = vst [vmem:[%s152 + $0x348] sm:$0xff] %v494
        %645 = vst [vmem:[%s152 + $0x350] sm:$0xff] %v496
        %646 = vst [vmem:[%s152 + $0x358] sm:$0xff] %v498
        %647 = vst [vmem:[%s152 + $0x360] sm:$0xff] %v500
        %648 = vst [vmem:[%s152 + $0x368] sm:$0xff] %v502
        %649 = vst [vmem:[%s152 + $0x370] sm:$0xff] %v504
        %650 = vst [vmem:[%s152 + $0x378] sm:$0xff] %v506
        %651 = vst [vmem:[%s152 + $0x380] sm:$0xff] %v508
        %652 = vst [vmem:[%s152 + $0x388] sm:$0xff] %v510
        %653 = vst [vmem:[%s152 + $0x390] sm:$0xff] %v512
        %654 = vst [vmem:[%s152 + $0x398] sm:$0xff] %v514
        %655 = vst [vmem:[%s152 + $0x3a0] sm:$0xff] %v516
        %656 = vst [vmem:[%s152 + $0x3a8] sm:$0xff] %v518
        %657 = vst [vmem:[%s152 + $0x3b0] sm:$0xff] %v520
        %658 = vst [vmem:[%s152 + $0x3b8] sm:$0xff] %v522
        %659 = vst [vmem:[%s152 + $0x3c0] sm:$0xff] %v524
        %660 = vst [vmem:[%s152 + $0x3c8] sm:$0xff] %v526
        %661 = vst [vmem:[%s152 + $0x3d0] sm:$0xff] %v528
        %662 = vst [vmem:[%s152 + $0x3d8] sm:$0xff] %v530
        %663 = vst [vmem:[%s152 + $0x3e0] sm:$0xff] %v532
        %664 = vst [vmem:[%s152 + $0x3e8] sm:$0xff] %v534
        %665 = vst [vmem:[%s152 + $0x3f0] sm:$0xff] %v536
        %666 = vst [vmem:[%s152 + $0x3f8] sm:$0xff] %v538
        %s667 = sand.u32 %s68, 1
        %s668 = scalar_lea.sflag [#allocation4], %s667
        %s669 = sand.u32 %s68, 1
        %s670 = smul.addr %s669, 1024
        %s671 = scalar_lea.vmem [#allocation5], %s670
        // Predicated region
        $region29: #{tpu_custom_call.1} parent=23 // pred_check
          %p672 = pneg %p78
        $region30: #{tpu_custom_call.1} parent=23 // pred_check_branch
          %674 = sbr.rel (%p672) target = $region32
        $region31: #{tpu_custom_call.1} parent=23 // pred_region
          %s675 = smul.u32 128, %s23
          %677 = vsyncadd %s668, 0
          %s678 = smul.addr %s22, 128
          %s679 = sadd.s32 %s675, %s678
          %s680 = smul.addr %s679, 8
          %s681 = scalar_lea.hbm %s1, %s680
          %s683 = sshll.u32 %s671, 4
          %s684 = int_to_ptr.vmem [resolvable:$true] %s683
          %s685 = sshll.u32 %s681, 4
          %s686 = int_to_ptr.hbm [resolvable:$true] %s685
          %688 = dma.vmem_to_hbm [thread:$0]  %s684, 16384, %s686, %s668
        $region32: #{tpu_custom_call.1} parent=23 // pred_fallthru
          _
      $region24: #{tpu_custom_call.1} parent=5 // pred_fallthru
        _
      %p689 = scmp.le.s32.totalorder 2, %s13
      // Predicated region
      $region33: #{tpu_custom_call.1} parent=5 // pred_check
        %p690 = pneg %p689
      $region34: #{tpu_custom_call.1} parent=5 // pred_check_branch
        %692 = sbr.rel (%p690) target = $region36
      $region35: #{tpu_custom_call.1} parent=5 // pred_region
        %s693 = ssub.s32 %s13, 2
        // Predicated region
        $region37: #{tpu_custom_call.1} parent=35 // pred_check
          %p694 = pneg %p84
        $region38: #{tpu_custom_call.1} parent=35 // pred_check_branch
          %696 = sbr.rel (%p694) target = $region40
        $region39: #{tpu_custom_call.1} parent=35 // pred_region
          %s697 = sand.u32 %s69, 1
          %s698 = scalar_lea.sflag [#allocation4], %s697
          %s699 = sand.u32 %s69, 1
          %s700 = smul.addr %s699, 1024
          %s701 = scalar_lea.vmem [#allocation5], %s700
          %703 = dma.done %s698, 16384
        $region40: #{tpu_custom_call.1} parent=35 // pred_fallthru
          _
      $region36: #{tpu_custom_call.1} parent=5 // pred_fallthru
        _
    $region6: #{tpu_custom_call.1} parent=1 // loop_footer
      %s17 = sadd.s32 1, %s13
    $region7: #{tpu_custom_call.1} parent=1 // loop_footer_branch
      %12 = sbr.rel target = $region3
    $region8: #{tpu_custom_call.1} parent=1 // loop_exit
      _
    %704 = vsyncpa [#allocation3], 1
    %s705 = scalar_lea.sflag [#allocation3], 1
    %706 = vsyncpa %s705, 1
    %707 = vsyncpa [#allocation4], 1
    %s708 = scalar_lea.sflag [#allocation4], 1
    %709 = vsyncpa %s708, 1

</llo_original>
